<compile_context>
chip_gen: v5e
topology: v5e:2x2
jax: 0.10.0
libtpu: 0.0.40
codegen_flags: <defaults>
</compile_context>

<pallas_src>
import jax
import jax.numpy as jnp
from jax import lax
from jax.experimental import pallas as pl
from jax.experimental.pallas import tpu as pltpu


def _helgason_kernel(x_ref, u_ref, v_ref, o_ref):
    # x: [TM, in], U: [TN, r], V: [in, r]  (S already folded into V).
    # tmp = x @ V_scaled -> [TM, r]   (contract in_features)
    tmp = lax.dot_general(
        x_ref[...], v_ref[...],
        dimension_numbers=(((1,), (0,)), ((), ())),
        preferred_element_type=jnp.float32,
    )
    # y = tmp @ U^T -> [TM, TN]  (contract rank axis; no in-kernel transpose)
    y = lax.dot_general(
        tmp.astype(u_ref.dtype), u_ref[...],
        dimension_numbers=(((1,), (1,)), ((), ())),
        preferred_element_type=jnp.float32,
    )
    o_ref[...] = y.astype(o_ref.dtype)


def _round_up(x, m):
    return ((x + m - 1) // m) * m


def _vmem_limit_bytes():
    # ~3/4 of physical VMEM: ~96 MiB on v5e/v6e (128 MiB), ~48 MiB on v7x (64 MiB).
    try:
        phys = int(pltpu.get_tpu_info().vmem_capacity_bytes)
    except Exception:
        phys = 64 * 1024 * 1024  # conservative (v7x-sized) fallback
    return (phys * 3) // 4


def fast_helgason_mlp(x, U, S, V, *, tm_max=512, compute_dtype=None, out_dtype=None):
    """Forward of FastHelgasonMLP.

    x: [..., in_features]; U: [out_features, rank]; S: [rank]; V: [in_features, rank]
    returns [..., out_features] = x @ (U @ diag(S) @ V^T)^T
    """
    in_features = x.shape[-1]
    out_features, rank = U.shape
    lead = x.shape[:-1]
    m = 1
    for d in lead:
        m *= d

    if compute_dtype is None:
        compute_dtype = x.dtype   # keep caller numerics by default
    if out_dtype is None:
        out_dtype = x.dtype

    # Fold S into V (removes one DMA'd input and a per-tile broadcast multiply).
    V_scaled = (V.astype(jnp.float32) * S.astype(jnp.float32)[None, :]).astype(compute_dtype)

    # Pad the output/lane dimension to a multiple of 128 so stores are dense,
    # unmasked vst (zero rows in U -> zero output columns, sliced off below).
    n_pad = max(128, _round_up(out_features, 128))
    U_p = U.astype(compute_dtype)
    if n_pad != out_features:
        U_p = jnp.pad(U_p, ((0, n_pad - out_features), (0, 0)))

    x2d = x.reshape(m, in_features).astype(compute_dtype)

    # N tile: full when small, else 256 (matches v6e/v7x 2x256 MXU) or 128.
    if n_pad <= 512:
        tn = n_pad
    elif n_pad % 256 == 0:
        tn = 256
    else:
        tn = 128
    n_tiles = pl.cdiv(n_pad, tn)

    # --- Per-generation VMEM budgeting, explicit vmem_limit_bytes -----------
    vmem_limit = int(_vmem_limit_bytes())
    usable = (vmem_limit * 17) // 20  # ~85%: leave headroom for compiler scratch
    cd_bytes = jnp.dtype(compute_dtype).itemsize
    out_bytes = jnp.dtype(out_dtype).itemsize
    # Factors counted double-buffered (conservative; Buffered(1) only adds headroom).
    factor_bytes = 2 * (int(U_p.size) + int(V_scaled.size)) * cd_bytes
    # Per M-row: double-buffered x tile + double-buffered y tile + f32 intermediates.
    per_row = 2 * in_features * cd_bytes + 2 * tn * out_bytes + 4 * (rank + tn)
    tm_cap = max(8, (usable - factor_bytes) // max(per_row, 1))

    sub = 8 if cd_bytes >= 4 else (16 if cd_bytes == 2 else 32)  # sublane packing
    tm = min(tm_max, int(tm_cap), _round_up(m, sub))
    tm = max(sub, (tm // sub) * sub)

    # v7x has 2 TensorCores: ensure >= 2 grid tiles of work whenever m allows.
    if n_tiles == 1 and tm >= m and m >= 2 * sub:
        tm = max(sub, _round_up(pl.cdiv(m, 2), sub))

    m_tiles = pl.cdiv(m, tm)
    grid = (m_tiles, n_tiles)

    flops = 2 * m * rank * (in_features + n_pad)
    bytes_accessed = (int(x2d.size) * cd_bytes + int(U_p.size) * cd_bytes
                      + int(V_scaled.size) * cd_bytes + m * n_pad * out_bytes)
    cost = pl.CostEstimate(flops=flops, transcendentals=0,
                           bytes_accessed=bytes_accessed)

    def _call(single_buffer_factors):
        def resident_spec(shape, index_map):
            # Constant-index blocks never get re-fetched -> one buffer suffices.
            if single_buffer_factors:
                return pl.BlockSpec(shape, index_map, pipeline_mode=pl.Buffered(1))
            return pl.BlockSpec(shape, index_map)

        # U is grid-constant only when there is a single N tile.
        if n_tiles == 1:
            u_spec = resident_spec((tn, rank), lambda i, j: (0, 0))
        else:
            u_spec = pl.BlockSpec((tn, rank), lambda i, j: (j, 0))
        v_spec = resident_spec((in_features, rank), lambda i, j: (0, 0))

        return pl.pallas_call(
            _helgason_kernel,
            out_shape=jax.ShapeDtypeStruct((m, n_pad), out_dtype),
            grid_spec=pltpu.PrefetchScalarGridSpec(
                num_scalar_prefetch=0,
                grid=grid,
                in_specs=[
                    # x: tiled over M, full in_features per block
                    pl.BlockSpec((tm, in_features), lambda i, j: (i, 0)),
                    u_spec,
                    v_spec,
                ],
                out_specs=pl.BlockSpec((tm, tn), lambda i, j: (i, j)),
            ),
            compiler_params=pltpu.CompilerParams(
                dimension_semantics=("parallel", "parallel"),
                vmem_limit_bytes=vmem_limit,
            ),
            cost_estimate=cost,
        )(x2d, U_p, V_scaled)

    try:
        y2d = _call(True)
    except Exception:
        # Fallback if this JAX build rejects pipeline_mode=pl.Buffered(1).
        y2d = _call(False)

    return y2d[:, :out_features].reshape(*lead, out_features)


def reference(x, U, S, V):
    w = (U * S[None, :]) @ V.T          # [out, in]
    return x @ w.T


if __name__ == "__main__":
    key = jax.random.PRNGKey(0)
    k_x, k_u, k_s, k_v = jax.random.split(key, 4)

    # Small shapes consistent with the module: original_weight [out=32, in=32]
    # compressed to rank=8; activations [batch=2, seq=8, in_features=32].
    batch, seq = 2, 8
    in_features, out_features, rank = 32, 32, 8

    x = jax.random.normal(k_x, (batch, seq, in_features), dtype=jnp.float32)
    U = jax.random.normal(k_u, (out_features, rank), dtype=jnp.float32) * 0.1
    S = jnp.abs(jax.random.normal(k_s, (rank,), dtype=jnp.float32)) + 0.5
    V = jax.random.normal(k_v, (in_features, rank), dtype=jnp.float32) * 0.1

    y_ref = reference(x, U, S, V)

    # f32 path (tight check).
    y = fast_helgason_mlp(x, U, S, V)
    y = jax.block_until_ready(y)
    assert y.shape == (batch, seq, out_features)
    assert jnp.allclose(y, y_ref, atol=1e-5, rtol=1e-5), "f32 mismatch vs reference"

    # bf16 traffic path (mem-bound kernel: halves x/U/V HBM bytes); loose check.
    y_bf16 = fast_helgason_mlp(x, U, S, V, compute_dtype=jnp.bfloat16)
    y_bf16 = jax.block_until_ready(y_bf16)
    assert y_bf16.shape == (batch, seq, out_features)
    assert jnp.allclose(y_bf16.astype(jnp.float32), y_ref, atol=5e-2, rtol=5e-2), \
        "bf16 mismatch vs reference"

    print("KERNEL_OK")
</pallas_src>

<mosaic_0001>
module attributes {stable_mosaic.version = 11 : i64} {
  func.func @_helgason_kernel(%arg0: i32, %arg1: i32, %arg2: memref<8x32xf32, #tpu.memory_space<vmem>>, %arg3: memref<128x8xf32, #tpu.memory_space<vmem>>, %arg4: memref<32x8xf32, #tpu.memory_space<vmem>>, %arg5: memref<8x128xf32, #tpu.memory_space<vmem>>) attributes {dimension_semantics = [#tpu.dimension_semantics<parallel>, #tpu.dimension_semantics<parallel>], iteration_bounds = array<i64: 2, 1>, scalar_prefetch = 0 : i64, scratch_operands = 0 : i64, tpu.core_type = #tpu.core_type<tc>, window_params = [{transform_indices = @transform_0, window_bounds = array<i64: 8, 32>}, {pipeline_mode = #tpu.pipeline_mode<synchronous>, transform_indices = @transform_1, window_bounds = array<i64: 128, 8>}, {pipeline_mode = #tpu.pipeline_mode<synchronous>, transform_indices = @transform_2, window_bounds = array<i64: 32, 8>}, {transform_indices = @transform_3, window_bounds = array<i64: 8, 128>}]} {
    %c0 = arith.constant 0 : index
    %c0_0 = arith.constant 0 : index
    %0 = vector.load %arg2[%c0, %c0_0] : memref<8x32xf32, #tpu.memory_space<vmem>>, vector<8x32xf32>
    %c0_1 = arith.constant 0 : index
    %c0_2 = arith.constant 0 : index
    %1 = vector.load %arg4[%c0_1, %c0_2] : memref<32x8xf32, #tpu.memory_space<vmem>>, vector<32x8xf32>
    %cst = arith.constant dense<0.000000e+00> : vector<8x8xf32>
    %2 = tpu.matmul %0, %1, %cst {dimension_numbers = #tpu.dot_dimension_numbers<[1], [0], [0], [1], [0, 0, 1, 1], [], []>} : vector<8x32xf32>, vector<32x8xf32>, vector<8x8xf32> -> vector<8x8xf32>
    %c0_3 = arith.constant 0 : index
    %c0_4 = arith.constant 0 : index
    %3 = vector.load %arg3[%c0_3, %c0_4] : memref<128x8xf32, #tpu.memory_space<vmem>>, vector<128x8xf32>
    %cst_5 = arith.constant dense<0.000000e+00> : vector<8x128xf32>
    %4 = tpu.matmul %2, %3, %cst_5 {dimension_numbers = #tpu.dot_dimension_numbers<[1], [1], [0], [0], [0, 0, 1, 0], [], []>} : vector<8x8xf32>, vector<128x8xf32>, vector<8x128xf32> -> vector<8x128xf32>
    %c0_6 = arith.constant 0 : index
    %c0_7 = arith.constant 0 : index
    %5 = vector.load %arg5[%c0_6, %c0_7] : memref<8x128xf32, #tpu.memory_space<vmem>>, vector<8x128xf32>
    tpu.vector_store %arg5[%c0_6, %c0_7], %4 {strides = array<i32>} : memref<8x128xf32, #tpu.memory_space<vmem>>, vector<8x128xf32>,
    return
  }
  func.func @transform_0(%arg0: i32, %arg1: i32) -> (i32, i32) {
    %c0_i32 = arith.constant 0 : i32
    %c0_i32_0 = arith.constant 0 : i32
    return %arg0, %c0_i32 : i32, i32
  }
  func.func @transform_1(%arg0: i32, %arg1: i32) -> (i32, i32) {
    %c0_i32 = arith.constant 0 : i32
    %c0_i32_0 = arith.constant 0 : i32
    %c0_i32_1 = arith.constant 0 : i32
    return %c0_i32, %c0_i32_0 : i32, i32
  }
  func.func @transform_2(%arg0: i32, %arg1: i32) -> (i32, i32) {
    %c0_i32 = arith.constant 0 : i32
    %c0_i32_0 = arith.constant 0 : i32
    %c0_i32_1 = arith.constant 0 : i32
    return %c0_i32, %c0_i32_0 : i32, i32
  }
  func.func @transform_3(%arg0: i32, %arg1: i32) -> (i32, i32) {
    %c0_i32 = arith.constant 0 : i32
    return %arg0, %arg1 : i32, i32
  }
}

module attributes {stable_mosaic.version = 11 : i64} {
  func.func @_helgason_kernel(%arg0: i32, %arg1: i32, %arg2: memref<8x32xf32, #tpu.memory_space<vmem>>, %arg3: memref<128x8xf32, #tpu.memory_space<vmem>>, %arg4: memref<32x8xf32, #tpu.memory_space<vmem>>, %arg5: memref<8x128xf32, #tpu.memory_space<vmem>>) attributes {dimension_semantics = [#tpu.dimension_semantics<parallel>, #tpu.dimension_semantics<parallel>], iteration_bounds = array<i64: 2, 1>, scalar_prefetch = 0 : i64, scratch_operands = 0 : i64, tpu.core_type = #tpu.core_type<tc>, window_params = [{transform_indices = @transform_0, window_bounds = array<i64: 8, 32>}, {pipeline_mode = #tpu.pipeline_mode<synchronous>, transform_indices = @transform_1, window_bounds = array<i64: 128, 8>}, {pipeline_mode = #tpu.pipeline_mode<synchronous>, transform_indices = @transform_2, window_bounds = array<i64: 32, 8>}, {transform_indices = @transform_3, window_bounds = array<i64: 8, 128>}]} {
    %c0 = arith.constant 0 : index
    %c0_0 = arith.constant 0 : index
    %0 = vector.load %arg2[%c0, %c0_0] : memref<8x32xf32, #tpu.memory_space<vmem>>, vector<8x32xf32>
    %c0_1 = arith.constant 0 : index
    %c0_2 = arith.constant 0 : index
    %1 = vector.load %arg4[%c0_1, %c0_2] : memref<32x8xf32, #tpu.memory_space<vmem>>, vector<32x8xf32>
    %cst = arith.constant dense<0.000000e+00> : vector<8x8xf32>
    %2 = tpu.matmul %0, %1, %cst {dimension_numbers = #tpu.dot_dimension_numbers<[1], [0], [0], [1], [0, 0, 1, 1], [], []>} : vector<8x32xf32>, vector<32x8xf32>, vector<8x8xf32> -> vector<8x8xf32>
    %c0_3 = arith.constant 0 : index
    %c0_4 = arith.constant 0 : index
    %3 = vector.load %arg3[%c0_3, %c0_4] : memref<128x8xf32, #tpu.memory_space<vmem>>, vector<128x8xf32>
    %cst_5 = arith.constant dense<0.000000e+00> : vector<8x128xf32>
    %4 = tpu.matmul %2, %3, %cst_5 {dimension_numbers = #tpu.dot_dimension_numbers<[1], [1], [0], [0], [0, 0, 1, 0], [], []>} : vector<8x8xf32>, vector<128x8xf32>, vector<8x128xf32> -> vector<8x128xf32>
    %c0_6 = arith.constant 0 : index
    %c0_7 = arith.constant 0 : index
    %5 = vector.load %arg5[%c0_6, %c0_7] : memref<8x128xf32, #tpu.memory_space<vmem>>, vector<8x128xf32>
    tpu.vector_store %arg5[%c0_6, %c0_7], %4 {strides = array<i32>} : memref<8x128xf32, #tpu.memory_space<vmem>>, vector<8x128xf32>,
    return
  }
  func.func @transform_0(%arg0: i32, %arg1: i32) -> (i32, i32) {
    %c0_i32 = arith.constant 0 : i32
    %c0_i32_0 = arith.constant 0 : i32
    return %arg0, %c0_i32 : i32, i32
  }
  func.func @transform_1(%arg0: i32, %arg1: i32) -> (i32, i32) {
    %c0_i32 = arith.constant 0 : i32
    %c0_i32_0 = arith.constant 0 : i32
    %c0_i32_1 = arith.constant 0 : i32
    return %c0_i32, %c0_i32_0 : i32, i32
  }
  func.func @transform_2(%arg0: i32, %arg1: i32) -> (i32, i32) {
    %c0_i32 = arith.constant 0 : i32
    %c0_i32_0 = arith.constant 0 : i32
    %c0_i32_1 = arith.constant 0 : i32
    return %c0_i32, %c0_i32_0 : i32, i32
  }
  func.func @transform_3(%arg0: i32, %arg1: i32) -> (i32, i32) {
    %c0_i32 = arith.constant 0 : i32
    return %arg0, %arg1 : i32, i32
  }
}

</mosaic_0001>

<llo_original>
// kernel: tpu_custom_call.1
$region0: #{tpu_custom_call.1}
  #allocation0 [shape = 'u32[]', space=smem, size = 0x4, offset = 0x4, fixed_abs, tag = 'smem constant byte address 0x4 - core index']
  #allocation1 [shape = 'u32[72,128]{1,0:T(1,128)}', space=vmem, size = 0x9000, scoped, tag = 'internal scratch']
  %s0 = inlined_call_operand.vmem [shape: f32[16,32], index: 0, kind: input, shape index: {}]
  %s1 = inlined_call_operand.vmem [shape: f32[128,8], index: 1, kind: input, shape index: {}]
  %s2 = inlined_call_operand.vmem [shape: f32[32,8], index: 2, kind: input, shape index: {}]
  %s3 = inlined_call_operand.hbm [shape: f32[16,128], index: 3, kind: output, shape index: {}]
  %s4 = sld [smem:[#allocation0]]
  $region45: #{tpu_custom_call.1} parent=0
    _
  %s6 = ssub.s32 1, %s4
  %s7 = scalar_select 0, %s6, %s4
  $region1: #{tpu_custom_call.1} parent=0
    #allocation2 [shape = 'u8[8192]{0}', space=vmem, size = 0x2000, scoped, tag = 'output window, operand 0']
    #allocation3 [shape = 's32[2]{0}', space=sflag, size = 0x8, scoped, tag = 'scoped memory for tpu_custom_call.1']
    %8 = vsyncpa [#allocation3], 0
    %s9 = scalar_lea.sflag [#allocation3], 1
    %10 = vsyncpa %s9, 0
    loop: start=0, step=1, limit=4
    $region2: #{tpu_custom_call.1} parent=1 // loop_pre_header
      _
    $region3: #{tpu_custom_call.1} parent=1 // loop_header
      %s12 = sphi 0, %s16
      %p13 = scmp.ge.s32.totalorder %s12, 4
      %s19 = sphi 0, %s31
      %s20 = sphi 0, %s27
      %s21 = sphi 0, %s19
      %s22 = sphi 0, %s20
      %s23 = sphi 0, %s21
      %s24 = sphi 0, %s22
      %s34 = sphi 0, %s36
      %s37 = sphi 0, %s34
      %s38 = sphi 0, %s37
      %s54 = sphi 0, %s38
      %s58 = sphi 0, %s58
      %s60 = sphi 0, %s58
      %s61 = sphi 0, %s60
      %s75 = sphi 0, %s61
      %s79 = sphi 0, %s79
      %s81 = sphi 0, %s79
      %s82 = sphi 0, %s81
      %s96 = sphi 0, %s82
      %s104 = sphi 0, %s106
      %s107 = sphi 0, %s104
      %s108 = sphi 0, %s107
      %s124 = sphi 0, %s108
    $region4: #{tpu_custom_call.1} parent=1 // loop_header_branch
      %15 = sbr.rel (%p13) target = $region8
    $region5: #{tpu_custom_call.1} parent=1 // loop_body
      %s17 = ssub.s32 %s12, 1
      %s18 = ssub.s32 %s12, 2
      %s25 = sadd.s32 1, %s20
      %p26 = scmp.ge.s32.totalorder %s25, 1
      %s27 = scalar_select %p26, 0, %s25
      %s28 = sadd.s32 1, %s19
      %s29 = scalar_select %p26, %s28, %s19
      %p30 = scmp.ge.s32.totalorder %s29, 2
      %s31 = scalar_select %p30, 0, %s29
      %s32 = ssub.s32 %s19, %s31
      %p33 = scmp.eq.s32.totalorder %s32, 0
      %s35 = sadd.s32 %s34, 1
      %s36 = scalar_select %p33, %s34, %s35
      %p39 = pneg %p33
      %p40 = scmp.eq.s32.totalorder %s12, 1
      %p41 = por %p39, %p40
      %p42 = scmp.ne.s32.totalorder %s34, %s37
      %p43 = scmp.eq.s32.totalorder %s12, 0
      %p44 = por %p42, %p43
      %p45 = scmp.ne.s32.totalorder %s34, %s37
      %p46 = scmp.eq.s32.totalorder %s17, 1
      %p47 = por %p45, %p46
      %p48 = scmp.ne.s32.totalorder %s37, %s38
      %p49 = scmp.eq.s32.totalorder %s17, 0
      %p50 = por %p48, %p49
      %p51 = scmp.ne.s32.totalorder %s37, %s38
      %p52 = scmp.eq.s32.totalorder %s18, 1
      %p53 = por %p51, %p52
      %p55 = scmp.ne.s32.totalorder %s38, %s54
      %p56 = scmp.eq.s32.totalorder %s18, 0
      %p57 = por %p55, %p56
      %s59 = sadd.s32 %s58, 1
      %p62 = scmp.eq.s32.totalorder %s12, 1
      %p63 = scmp.ne.s32.totalorder %s58, %s60
      %p64 = scmp.eq.s32.totalorder %s12, 0
      %p65 = por %p63, %p64
      %p66 = scmp.ne.s32.totalorder %s58, %s60
      %p67 = scmp.eq.s32.totalorder %s17, 1
      %p68 = por %p66, %p67
      %p69 = scmp.ne.s32.totalorder %s60, %s61
      %p70 = scmp.eq.s32.totalorder %s17, 0
      %p71 = por %p69, %p70
      %p72 = scmp.ne.s32.totalorder %s60, %s61
      %p73 = scmp.eq.s32.totalorder %s18, 1
      %p74 = por %p72, %p73
      %p76 = scmp.ne.s32.totalorder %s61, %s75
      %p77 = scmp.eq.s32.totalorder %s18, 0
      %p78 = por %p76, %p77
      %s80 = sadd.s32 %s79, 1
      %p83 = scmp.eq.s32.totalorder %s12, 1
      %p84 = scmp.ne.s32.totalorder %s79, %s81
      %p85 = scmp.eq.s32.totalorder %s12, 0
      %p86 = por %p84, %p85
      %p87 = scmp.ne.s32.totalorder %s79, %s81
      %p88 = scmp.eq.s32.totalorder %s17, 1
      %p89 = por %p87, %p88
      %p90 = scmp.ne.s32.totalorder %s81, %s82
      %p91 = scmp.eq.s32.totalorder %s17, 0
      %p92 = por %p90, %p91
      %p93 = scmp.ne.s32.totalorder %s81, %s82
      %p94 = scmp.eq.s32.totalorder %s18, 1
      %p95 = por %p93, %p94
      %p97 = scmp.ne.s32.totalorder %s82, %s96
      %p98 = scmp.eq.s32.totalorder %s18, 0
      %p99 = por %p97, %p98
      %s100 = ssub.s32 %s19, %s31
      %s101 = ssub.s32 %s20, %s27
      %s102 = sor.u32 %s100, %s101
      %p103 = scmp.eq.s32.totalorder %s102, 0
      %s105 = sadd.s32 %s104, 1
      %s106 = scalar_select %p103, %s104, %s105
      %p109 = pneg %p103
      %p110 = scmp.eq.s32.totalorder %s12, 1
      %p111 = por %p109, %p110
      %p112 = scmp.ne.s32.totalorder %s104, %s107
      %p113 = scmp.eq.s32.totalorder %s12, 0
      %p114 = por %p112, %p113
      %p115 = scmp.ne.s32.totalorder %s104, %s107
      %p116 = scmp.eq.s32.totalorder %s17, 1
      %p117 = por %p115, %p116
      %p118 = scmp.ne.s32.totalorder %s107, %s108
      %p119 = scmp.eq.s32.totalorder %s17, 0
      %p120 = por %p118, %p119
      %p121 = scmp.ne.s32.totalorder %s107, %s108
      %p122 = scmp.eq.s32.totalorder %s18, 1
      %p123 = por %p121, %p122
      %p125 = scmp.ne.s32.totalorder %s108, %s124
      %p126 = scmp.eq.s32.totalorder %s18, 0
      %p127 = por %p125, %p126
      %p128 = scmp.le.s32.totalorder 1, %s12
      %p129 = scmp.lt.s32.totalorder %s12, 3
      %p130 = pnand %p128, %p129
      %p131 = pneg %p130
      // Predicated region
      $region9: #{tpu_custom_call.1} parent=5 // pred_check
        _
      $region10: #{tpu_custom_call.1} parent=5 // pred_check_branch
        %133 = sbr.rel (%p130) target = $region12
      $region11: #{tpu_custom_call.1} parent=5 // pred_region
        %s134 = ssub.s32 %s12, 1
        // Predicated region
        $region13: #{tpu_custom_call.1} parent=11 // pred_check
          %p135 = pneg %p71
        $region14: #{tpu_custom_call.1} parent=11 // pred_check_branch
          %137 = sbr.rel (%p135) target = $region16
        $region15: #{tpu_custom_call.1} parent=11 // pred_region
          _
        $region16: #{tpu_custom_call.1} parent=11 // pred_fallthru
          _
        // Predicated region
        $region17: #{tpu_custom_call.1} parent=11 // pred_check
          %p138 = pneg %p92
        $region18: #{tpu_custom_call.1} parent=11 // pred_check_branch
          %140 = sbr.rel (%p138) target = $region20
        $region19: #{tpu_custom_call.1} parent=11 // pred_region
          _
        $region20: #{tpu_custom_call.1} parent=11 // pred_fallthru
          _
      $region12: #{tpu_custom_call.1} parent=5 // pred_fallthru
        _
      %p141 = scmp.lt.s32.totalorder %s12, 2
      // Predicated region
      $region21: #{tpu_custom_call.1} parent=5 // pred_check
        %p142 = pneg %p141
      $region22: #{tpu_custom_call.1} parent=5 // pred_check_branch
        %144 = sbr.rel (%p142) target = $region24
      $region23: #{tpu_custom_call.1} parent=5 // pred_region
        // Predicated region
        $region25: #{tpu_custom_call.1} parent=23 // pred_check
          %p145 = pneg %p44
        $region26: #{tpu_custom_call.1} parent=23 // pred_check_branch
          %147 = sbr.rel (%p145) target = $region28
        $region27: #{tpu_custom_call.1} parent=23 // pred_region
          %p148 = scmp.lt.s32.totalorder %s19, 1
          %s149 = scalar_select %p148, %s19, 1
          %s150 = smul.addr %s149, 8
          %s151 = scalar_lea.vmem %s0, %s150
        $region28: #{tpu_custom_call.1} parent=23 // pred_fallthru
          _
      $region24: #{tpu_custom_call.1} parent=5 // pred_fallthru
        _
      %p152 = scmp.le.s32.totalorder 1, %s12
      %p153 = scmp.lt.s32.totalorder %s12, 3
      %p154 = pnand %p152, %p153
      %p155 = pneg %p154
      // Predicated region
      $region29: #{tpu_custom_call.1} parent=5 // pred_check
        _
      $region30: #{tpu_custom_call.1} parent=5 // pred_check_branch
        %157 = sbr.rel (%p154) target = $region32
      $region31: #{tpu_custom_call.1} parent=5 // pred_region
        %s158 = ssub.s32 %s12, 1
        %p159 = scmp.lt.s32.totalorder %s21, 1
        %s160 = scalar_select %p159, %s21, 1
        %s161 = smul.addr %s160, 8
        %s162 = scalar_lea.vmem %s0, %s161
        %p163 = pneg %p50
        %p164 = pneg %p47
        %p165 = pneg %p71
        %p166 = pneg %p68
        %p167 = pneg %p92
        %p168 = pneg %p89
        %p169 = pneg %p120
        %p170 = pneg %p117
        %s171 = sand.u32 %s107, 1
        %s172 = scalar_lea.sflag [#allocation3], %s171
        %s173 = sand.u32 %s107, 1
        %s174 = smul.addr %s173, 8
        %s175 = scalar_lea.vmem [#allocation2], %s174
        %p176 = scmp.lt.s32.totalorder %s21, 1
        %s177 = scalar_select %p176, %s21, 1
        %s178 = smul.addr %s177, 8
        %s179 = scalar_lea.vmem %s0, %s178
        %v180 = vld [vmem:[%s179] sm:$0xff]
        %v181 = vld [vmem:[%s2] sm:$0xff]
        %v182 = vld [vmem:[%s2 + $0x8] sm:$0xff]
        %v183 = vld [vmem:[%s2 + $0x10] sm:$0xff]
        %v184 = vld [vmem:[%s2 + $0x18] sm:$0xff]
        %vm185 = vcmask 261120
        %v187 = vsel %vm185, %v180, 0
        %189 = vmatpush.msra.mxu0 0.0
        %190 = vmatpush.msra.mxu0 0.0
        %191 = vmatpush.msra.mxu0 0.0
        %192 = vmatpush.msra.mxu0 0.0
        %193 = vmatpush.msra.mxu0 0.0
        %194 = vmatpush.msra.mxu0 0.0
        %195 = vmatpush.msra.mxu0 0.0
        %196 = vmatpush.msra.mxu0 0.0
        %197 = vmatpush.msra.mxu0 0.0
        %198 = vmatpush.msra.mxu0 0.0
        %199 = vmatpush.msra.mxu0 0.0
        %200 = vmatpush.msra.mxu0 0.0
        %201 = vmatpush.msra.mxu0 %v184
        %202 = vmatpush.msra.mxu0 %v183
        %203 = vmatpush.msra.mxu0 %v182
        %204 = vmatpush.msra.mxu0 %v181
        %205 = vmatmul.f32.gmra.mxu0 %v187
        %v206 = vpop.f32.mrf.mxu0
        %v207 = vadd.f32 0.0, %v206
        %208 = vdwg.mxu0
        %v209 = vld [vmem:[%s1] sm:$0xff]
        %v210 = vld [vmem:[%s1 + $0x8] sm:$0xff]
        %v211 = vld [vmem:[%s1 + $0x10] sm:$0xff]
        %v212 = vld [vmem:[%s1 + $0x18] sm:$0xff]
        %v213 = vld [vmem:[%s1 + $0x20] sm:$0xff]
        %v214 = vld [vmem:[%s1 + $0x28] sm:$0xff]
        %v215 = vld [vmem:[%s1 + $0x30] sm:$0xff]
        %v216 = vld [vmem:[%s1 + $0x38] sm:$0xff]
        %v217 = vld [vmem:[%s1 + $0x40] sm:$0xff]
        %v218 = vld [vmem:[%s1 + $0x48] sm:$0xff]
        %v219 = vld [vmem:[%s1 + $0x50] sm:$0xff]
        %v220 = vld [vmem:[%s1 + $0x58] sm:$0xff]
        %v221 = vld [vmem:[%s1 + $0x60] sm:$0xff]
        %v222 = vld [vmem:[%s1 + $0x68] sm:$0xff]
        %v223 = vld [vmem:[%s1 + $0x70] sm:$0xff]
        %v224 = vld [vmem:[%s1 + $0x78] sm:$0xff]
        %vm225 = vcmask 64512
        %v227 = vsel %vm225, %v207, 0
        %v230 = vsel %vm225, %v209, 0
        %v233 = vsel %vm225, %v210, 0
        %v236 = vsel %vm225, %v211, 0
        %v239 = vsel %vm225, %v212, 0
        %v242 = vsel %vm225, %v213, 0
        %v245 = vsel %vm225, %v214, 0
        %v248 = vsel %vm225, %v215, 0
        %v251 = vsel %vm225, %v216, 0
        %v254 = vsel %vm225, %v217, 0
        %v257 = vsel %vm225, %v218, 0
        %v260 = vsel %vm225, %v219, 0
        %v263 = vsel %vm225, %v220, 0
        %v266 = vsel %vm225, %v221, 0
        %v269 = vsel %vm225, %v222, 0
        %v272 = vsel %vm225, %v223, 0
        %v275 = vsel %vm225, %v224, 0
        %277 = vmatpush.xpose.msra.mxu0 %v275
        %278 = vmatpush.xpose.msra.mxu0 %v272
        %279 = vmatpush.xpose.msra.mxu0 %v269
        %280 = vmatpush.xpose.msra.mxu0 %v266
        %281 = vmatpush.xpose.msra.mxu0 %v263
        %282 = vmatpush.xpose.msra.mxu0 %v260
        %283 = vmatpush.xpose.msra.mxu0 %v257
        %284 = vmatpush.xpose.msra.mxu0 %v254
        %285 = vmatpush.xpose.msra.mxu0 %v251
        %286 = vmatpush.xpose.msra.mxu0 %v248
        %287 = vmatpush.xpose.msra.mxu0 %v245
        %288 = vmatpush.xpose.msra.mxu0 %v242
        %289 = vmatpush.xpose.msra.mxu0 %v239
        %290 = vmatpush.xpose.msra.mxu0 %v236
        %291 = vmatpush.xpose.msra.mxu0 %v233
        %292 = vmatpush.xpose.msra.mxu0 %v230
        %293 = vmatmul.f32.gmra.mxu0 %v227
        %v294 = vpop.f32.mrf.mxu0
        %v295 = vadd.f32 0.0, %v294
        %296 = vdwg.mxu0
        %297 = vst [vmem:[%s175] sm:$0xff] %v295
        %s298 = sand.u32 %s107, 1
        %s299 = scalar_lea.sflag [#allocation3], %s298
        %s300 = sand.u32 %s107, 1
        %s301 = smul.addr %s300, 8
        %s302 = scalar_lea.vmem [#allocation2], %s301
        // Predicated region
        $region33: #{tpu_custom_call.1} parent=31 // pred_check
          %p303 = pneg %p117
        $region34: #{tpu_custom_call.1} parent=31 // pred_check_branch
          %305 = sbr.rel (%p303) target = $region36
        $region35: #{tpu_custom_call.1} parent=31 // pred_region
          %307 = vsyncadd %s299, 0
          %s308 = sadd.s32 %s22, %s21
          %s309 = smul.addr %s308, 8
          %s310 = scalar_lea.hbm %s3, %s309
          %s312 = sshll.u32 %s302, 4
          %s313 = int_to_ptr.vmem [resolvable:$true] %s312
          %s314 = sshll.u32 %s310, 4
          %s315 = int_to_ptr.hbm [resolvable:$true] %s314
          %317 = dma.vmem_to_hbm [thread:$0]  %s313, 128, %s315, %s299
        $region36: #{tpu_custom_call.1} parent=31 // pred_fallthru
          _
      $region32: #{tpu_custom_call.1} parent=5 // pred_fallthru
        _
      %p318 = scmp.le.s32.totalorder 2, %s12
      // Predicated region
      $region37: #{tpu_custom_call.1} parent=5 // pred_check
        %p319 = pneg %p318
      $region38: #{tpu_custom_call.1} parent=5 // pred_check_branch
        %321 = sbr.rel (%p319) target = $region40
      $region39: #{tpu_custom_call.1} parent=5 // pred_region
        %s322 = ssub.s32 %s12, 2
        // Predicated region
        $region41: #{tpu_custom_call.1} parent=39 // pred_check
          %p323 = pneg %p123
        $region42: #{tpu_custom_call.1} parent=39 // pred_check_branch
          %325 = sbr.rel (%p323) target = $region44
        $region43: #{tpu_custom_call.1} parent=39 // pred_region
          %s326 = sand.u32 %s108, 1
          %s327 = scalar_lea.sflag [#allocation3], %s326
          %s328 = sand.u32 %s108, 1
          %s329 = smul.addr %s328, 8
          %s330 = scalar_lea.vmem [#allocation2], %s329
          %332 = dma.done %s327, 128
        $region44: #{tpu_custom_call.1} parent=39 // pred_fallthru
          _
      $region40: #{tpu_custom_call.1} parent=5 // pred_fallthru
        _
    $region6: #{tpu_custom_call.1} parent=1 // loop_footer
      %s16 = sadd.s32 1, %s12
    $region7: #{tpu_custom_call.1} parent=1 // loop_footer_branch
      %11 = sbr.rel target = $region3
    $region8: #{tpu_custom_call.1} parent=1 // loop_exit
      _
    %333 = vsyncpa [#allocation3], 1
    %s334 = scalar_lea.sflag [#allocation3], 1
    %335 = vsyncpa %s334, 1

// kernel: tpu_custom_call.1
$region0: #{tpu_custom_call.1}
  #allocation0 [shape = 'u32[]', space=smem, size = 0x4, offset = 0x4, fixed_abs, tag = 'smem constant byte address 0x4 - core index']
  #allocation1 [shape = 'u32[72,128]{1,0:T(1,128)}', space=vmem, size = 0x9000, scoped, tag = 'internal scratch']
  %s0 = inlined_call_operand.vmem [shape: f32[16,32], index: 0, kind: input, shape index: {}]
  %s1 = inlined_call_operand.vmem [shape: f32[128,8], index: 1, kind: input, shape index: {}]
  %s2 = inlined_call_operand.vmem [shape: f32[32,8], index: 2, kind: input, shape index: {}]
  %s3 = inlined_call_operand.hbm [shape: f32[16,128], index: 3, kind: output, shape index: {}]
  %s4 = sld [smem:[#allocation0]]
  $region45: #{tpu_custom_call.1} parent=0
    _
  %s6 = ssub.s32 1, %s4
  %s7 = scalar_select 0, %s6, %s4
  $region1: #{tpu_custom_call.1} parent=0
    #allocation2 [shape = 'u8[8192]{0}', space=vmem, size = 0x2000, scoped, tag = 'output window, operand 0']
    #allocation3 [shape = 's32[2]{0}', space=sflag, size = 0x8, scoped, tag = 'scoped memory for tpu_custom_call.1']
    %8 = vsyncpa [#allocation3], 0
    %s9 = scalar_lea.sflag [#allocation3], 1
    %10 = vsyncpa %s9, 0
    loop: start=0, step=1, limit=4
    $region2: #{tpu_custom_call.1} parent=1 // loop_pre_header
      _
    $region3: #{tpu_custom_call.1} parent=1 // loop_header
      %s12 = sphi 0, %s16
      %p13 = scmp.ge.s32.totalorder %s12, 4
      %s19 = sphi 0, %s31
      %s20 = sphi 0, %s27
      %s21 = sphi 0, %s19
      %s22 = sphi 0, %s20
      %s23 = sphi 0, %s21
      %s24 = sphi 0, %s22
      %s34 = sphi 0, %s36
      %s37 = sphi 0, %s34
      %s38 = sphi 0, %s37
      %s54 = sphi 0, %s38
      %s58 = sphi 0, %s58
      %s60 = sphi 0, %s58
      %s61 = sphi 0, %s60
      %s75 = sphi 0, %s61
      %s79 = sphi 0, %s79
      %s81 = sphi 0, %s79
      %s82 = sphi 0, %s81
      %s96 = sphi 0, %s82
      %s104 = sphi 0, %s106
      %s107 = sphi 0, %s104
      %s108 = sphi 0, %s107
      %s124 = sphi 0, %s108
    $region4: #{tpu_custom_call.1} parent=1 // loop_header_branch
      %15 = sbr.rel (%p13) target = $region8
    $region5: #{tpu_custom_call.1} parent=1 // loop_body
      %s17 = ssub.s32 %s12, 1
      %s18 = ssub.s32 %s12, 2
      %s25 = sadd.s32 1, %s20
      %p26 = scmp.ge.s32.totalorder %s25, 1
      %s27 = scalar_select %p26, 0, %s25
      %s28 = sadd.s32 1, %s19
      %s29 = scalar_select %p26, %s28, %s19
      %p30 = scmp.ge.s32.totalorder %s29, 2
      %s31 = scalar_select %p30, 0, %s29
      %s32 = ssub.s32 %s19, %s31
      %p33 = scmp.eq.s32.totalorder %s32, 0
      %s35 = sadd.s32 %s34, 1
      %s36 = scalar_select %p33, %s34, %s35
      %p39 = pneg %p33
      %p40 = scmp.eq.s32.totalorder %s12, 1
      %p41 = por %p39, %p40
      %p42 = scmp.ne.s32.totalorder %s34, %s37
      %p43 = scmp.eq.s32.totalorder %s12, 0
      %p44 = por %p42, %p43
      %p45 = scmp.ne.s32.totalorder %s34, %s37
      %p46 = scmp.eq.s32.totalorder %s17, 1
      %p47 = por %p45, %p46
      %p48 = scmp.ne.s32.totalorder %s37, %s38
      %p49 = scmp.eq.s32.totalorder %s17, 0
      %p50 = por %p48, %p49
      %p51 = scmp.ne.s32.totalorder %s37, %s38
      %p52 = scmp.eq.s32.totalorder %s18, 1
      %p53 = por %p51, %p52
      %p55 = scmp.ne.s32.totalorder %s38, %s54
      %p56 = scmp.eq.s32.totalorder %s18, 0
      %p57 = por %p55, %p56
      %s59 = sadd.s32 %s58, 1
      %p62 = scmp.eq.s32.totalorder %s12, 1
      %p63 = scmp.ne.s32.totalorder %s58, %s60
      %p64 = scmp.eq.s32.totalorder %s12, 0
      %p65 = por %p63, %p64
      %p66 = scmp.ne.s32.totalorder %s58, %s60
      %p67 = scmp.eq.s32.totalorder %s17, 1
      %p68 = por %p66, %p67
      %p69 = scmp.ne.s32.totalorder %s60, %s61
      %p70 = scmp.eq.s32.totalorder %s17, 0
      %p71 = por %p69, %p70
      %p72 = scmp.ne.s32.totalorder %s60, %s61
      %p73 = scmp.eq.s32.totalorder %s18, 1
      %p74 = por %p72, %p73
      %p76 = scmp.ne.s32.totalorder %s61, %s75
      %p77 = scmp.eq.s32.totalorder %s18, 0
      %p78 = por %p76, %p77
      %s80 = sadd.s32 %s79, 1
      %p83 = scmp.eq.s32.totalorder %s12, 1
      %p84 = scmp.ne.s32.totalorder %s79, %s81
      %p85 = scmp.eq.s32.totalorder %s12, 0
      %p86 = por %p84, %p85
      %p87 = scmp.ne.s32.totalorder %s79, %s81
      %p88 = scmp.eq.s32.totalorder %s17, 1
      %p89 = por %p87, %p88
      %p90 = scmp.ne.s32.totalorder %s81, %s82
      %p91 = scmp.eq.s32.totalorder %s17, 0
      %p92 = por %p90, %p91
      %p93 = scmp.ne.s32.totalorder %s81, %s82
      %p94 = scmp.eq.s32.totalorder %s18, 1
      %p95 = por %p93, %p94
      %p97 = scmp.ne.s32.totalorder %s82, %s96
      %p98 = scmp.eq.s32.totalorder %s18, 0
      %p99 = por %p97, %p98
      %s100 = ssub.s32 %s19, %s31
      %s101 = ssub.s32 %s20, %s27
      %s102 = sor.u32 %s100, %s101
      %p103 = scmp.eq.s32.totalorder %s102, 0
      %s105 = sadd.s32 %s104, 1
      %s106 = scalar_select %p103, %s104, %s105
      %p109 = pneg %p103
      %p110 = scmp.eq.s32.totalorder %s12, 1
      %p111 = por %p109, %p110
      %p112 = scmp.ne.s32.totalorder %s104, %s107
      %p113 = scmp.eq.s32.totalorder %s12, 0
      %p114 = por %p112, %p113
      %p115 = scmp.ne.s32.totalorder %s104, %s107
      %p116 = scmp.eq.s32.totalorder %s17, 1
      %p117 = por %p115, %p116
      %p118 = scmp.ne.s32.totalorder %s107, %s108
      %p119 = scmp.eq.s32.totalorder %s17, 0
      %p120 = por %p118, %p119
      %p121 = scmp.ne.s32.totalorder %s107, %s108
      %p122 = scmp.eq.s32.totalorder %s18, 1
      %p123 = por %p121, %p122
      %p125 = scmp.ne.s32.totalorder %s108, %s124
      %p126 = scmp.eq.s32.totalorder %s18, 0
      %p127 = por %p125, %p126
      %p128 = scmp.le.s32.totalorder 1, %s12
      %p129 = scmp.lt.s32.totalorder %s12, 3
      %p130 = pnand %p128, %p129
      %p131 = pneg %p130
      // Predicated region
      $region9: #{tpu_custom_call.1} parent=5 // pred_check
        _
      $region10: #{tpu_custom_call.1} parent=5 // pred_check_branch
        %133 = sbr.rel (%p130) target = $region12
      $region11: #{tpu_custom_call.1} parent=5 // pred_region
        %s134 = ssub.s32 %s12, 1
        // Predicated region
        $region13: #{tpu_custom_call.1} parent=11 // pred_check
          %p135 = pneg %p71
        $region14: #{tpu_custom_call.1} parent=11 // pred_check_branch
          %137 = sbr.rel (%p135) target = $region16
        $region15: #{tpu_custom_call.1} parent=11 // pred_region
          _
        $region16: #{tpu_custom_call.1} parent=11 // pred_fallthru
          _
        // Predicated region
        $region17: #{tpu_custom_call.1} parent=11 // pred_check
          %p138 = pneg %p92
        $region18: #{tpu_custom_call.1} parent=11 // pred_check_branch
          %140 = sbr.rel (%p138) target = $region20
        $region19: #{tpu_custom_call.1} parent=11 // pred_region
          _
        $region20: #{tpu_custom_call.1} parent=11 // pred_fallthru
          _
      $region12: #{tpu_custom_call.1} parent=5 // pred_fallthru
        _
      %p141 = scmp.lt.s32.totalorder %s12, 2
      // Predicated region
      $region21: #{tpu_custom_call.1} parent=5 // pred_check
        %p142 = pneg %p141
      $region22: #{tpu_custom_call.1} parent=5 // pred_check_branch
        %144 = sbr.rel (%p142) target = $region24
      $region23: #{tpu_custom_call.1} parent=5 // pred_region
        // Predicated region
        $region25: #{tpu_custom_call.1} parent=23 // pred_check
          %p145 = pneg %p44
        $region26: #{tpu_custom_call.1} parent=23 // pred_check_branch
          %147 = sbr.rel (%p145) target = $region28
        $region27: #{tpu_custom_call.1} parent=23 // pred_region
          %p148 = scmp.lt.s32.totalorder %s19, 1
          %s149 = scalar_select %p148, %s19, 1
          %s150 = smul.addr %s149, 8
          %s151 = scalar_lea.vmem %s0, %s150
        $region28: #{tpu_custom_call.1} parent=23 // pred_fallthru
          _
      $region24: #{tpu_custom_call.1} parent=5 // pred_fallthru
        _
      %p152 = scmp.le.s32.totalorder 1, %s12
      %p153 = scmp.lt.s32.totalorder %s12, 3
      %p154 = pnand %p152, %p153
      %p155 = pneg %p154
      // Predicated region
      $region29: #{tpu_custom_call.1} parent=5 // pred_check
        _
      $region30: #{tpu_custom_call.1} parent=5 // pred_check_branch
        %157 = sbr.rel (%p154) target = $region32
      $region31: #{tpu_custom_call.1} parent=5 // pred_region
        %s158 = ssub.s32 %s12, 1
        %p159 = scmp.lt.s32.totalorder %s21, 1
        %s160 = scalar_select %p159, %s21, 1
        %s161 = smul.addr %s160, 8
        %s162 = scalar_lea.vmem %s0, %s161
        %p163 = pneg %p50
        %p164 = pneg %p47
        %p165 = pneg %p71
        %p166 = pneg %p68
        %p167 = pneg %p92
        %p168 = pneg %p89
        %p169 = pneg %p120
        %p170 = pneg %p117
        %s171 = sand.u32 %s107, 1
        %s172 = scalar_lea.sflag [#allocation3], %s171
        %s173 = sand.u32 %s107, 1
        %s174 = smul.addr %s173, 8
        %s175 = scalar_lea.vmem [#allocation2], %s174
        %p176 = scmp.lt.s32.totalorder %s21, 1
        %s177 = scalar_select %p176, %s21, 1
        %s178 = smul.addr %s177, 8
        %s179 = scalar_lea.vmem %s0, %s178
        %v180 = vld [vmem:[%s179] sm:$0xff]
        %v181 = vld [vmem:[%s2] sm:$0xff]
        %v182 = vld [vmem:[%s2 + $0x8] sm:$0xff]
        %v183 = vld [vmem:[%s2 + $0x10] sm:$0xff]
        %v184 = vld [vmem:[%s2 + $0x18] sm:$0xff]
        %vm185 = vcmask 261120
        %v187 = vsel %vm185, %v180, 0
        %189 = vmatpush.msra.mxu0 0.0
        %190 = vmatpush.msra.mxu0 0.0
        %191 = vmatpush.msra.mxu0 0.0
        %192 = vmatpush.msra.mxu0 0.0
        %193 = vmatpush.msra.mxu0 0.0
        %194 = vmatpush.msra.mxu0 0.0
        %195 = vmatpush.msra.mxu0 0.0
        %196 = vmatpush.msra.mxu0 0.0
        %197 = vmatpush.msra.mxu0 0.0
        %198 = vmatpush.msra.mxu0 0.0
        %199 = vmatpush.msra.mxu0 0.0
        %200 = vmatpush.msra.mxu0 0.0
        %201 = vmatpush.msra.mxu0 %v184
        %202 = vmatpush.msra.mxu0 %v183
        %203 = vmatpush.msra.mxu0 %v182
        %204 = vmatpush.msra.mxu0 %v181
        %205 = vmatmul.f32.gmra.mxu0 %v187
        %v206 = vpop.f32.mrf.mxu0
        %v207 = vadd.f32 0.0, %v206
        %208 = vdwg.mxu0
        %v209 = vld [vmem:[%s1] sm:$0xff]
        %v210 = vld [vmem:[%s1 + $0x8] sm:$0xff]
        %v211 = vld [vmem:[%s1 + $0x10] sm:$0xff]
        %v212 = vld [vmem:[%s1 + $0x18] sm:$0xff]
        %v213 = vld [vmem:[%s1 + $0x20] sm:$0xff]
        %v214 = vld [vmem:[%s1 + $0x28] sm:$0xff]
        %v215 = vld [vmem:[%s1 + $0x30] sm:$0xff]
        %v216 = vld [vmem:[%s1 + $0x38] sm:$0xff]
        %v217 = vld [vmem:[%s1 + $0x40] sm:$0xff]
        %v218 = vld [vmem:[%s1 + $0x48] sm:$0xff]
        %v219 = vld [vmem:[%s1 + $0x50] sm:$0xff]
        %v220 = vld [vmem:[%s1 + $0x58] sm:$0xff]
        %v221 = vld [vmem:[%s1 + $0x60] sm:$0xff]
        %v222 = vld [vmem:[%s1 + $0x68] sm:$0xff]
        %v223 = vld [vmem:[%s1 + $0x70] sm:$0xff]
        %v224 = vld [vmem:[%s1 + $0x78] sm:$0xff]
        %vm225 = vcmask 64512
        %v227 = vsel %vm225, %v207, 0
        %v230 = vsel %vm225, %v209, 0
        %v233 = vsel %vm225, %v210, 0
        %v236 = vsel %vm225, %v211, 0
        %v239 = vsel %vm225, %v212, 0
        %v242 = vsel %vm225, %v213, 0
        %v245 = vsel %vm225, %v214, 0
        %v248 = vsel %vm225, %v215, 0
        %v251 = vsel %vm225, %v216, 0
        %v254 = vsel %vm225, %v217, 0
        %v257 = vsel %vm225, %v218, 0
        %v260 = vsel %vm225, %v219, 0
        %v263 = vsel %vm225, %v220, 0
        %v266 = vsel %vm225, %v221, 0
        %v269 = vsel %vm225, %v222, 0
        %v272 = vsel %vm225, %v223, 0
        %v275 = vsel %vm225, %v224, 0
        %277 = vmatpush.xpose.msra.mxu0 %v275
        %278 = vmatpush.xpose.msra.mxu0 %v272
        %279 = vmatpush.xpose.msra.mxu0 %v269
        %280 = vmatpush.xpose.msra.mxu0 %v266
        %281 = vmatpush.xpose.msra.mxu0 %v263
        %282 = vmatpush.xpose.msra.mxu0 %v260
        %283 = vmatpush.xpose.msra.mxu0 %v257
        %284 = vmatpush.xpose.msra.mxu0 %v254
        %285 = vmatpush.xpose.msra.mxu0 %v251
        %286 = vmatpush.xpose.msra.mxu0 %v248
        %287 = vmatpush.xpose.msra.mxu0 %v245
        %288 = vmatpush.xpose.msra.mxu0 %v242
        %289 = vmatpush.xpose.msra.mxu0 %v239
        %290 = vmatpush.xpose.msra.mxu0 %v236
        %291 = vmatpush.xpose.msra.mxu0 %v233
        %292 = vmatpush.xpose.msra.mxu0 %v230
        %293 = vmatmul.f32.gmra.mxu0 %v227
        %v294 = vpop.f32.mrf.mxu0
        %v295 = vadd.f32 0.0, %v294
        %296 = vdwg.mxu0
        %297 = vst [vmem:[%s175] sm:$0xff] %v295
        %s298 = sand.u32 %s107, 1
        %s299 = scalar_lea.sflag [#allocation3], %s298
        %s300 = sand.u32 %s107, 1
        %s301 = smul.addr %s300, 8
        %s302 = scalar_lea.vmem [#allocation2], %s301
        // Predicated region
        $region33: #{tpu_custom_call.1} parent=31 // pred_check
          %p303 = pneg %p117
        $region34: #{tpu_custom_call.1} parent=31 // pred_check_branch
          %305 = sbr.rel (%p303) target = $region36
        $region35: #{tpu_custom_call.1} parent=31 // pred_region
          %307 = vsyncadd %s299, 0
          %s308 = sadd.s32 %s22, %s21
          %s309 = smul.addr %s308, 8
          %s310 = scalar_lea.hbm %s3, %s309
          %s312 = sshll.u32 %s302, 4
          %s313 = int_to_ptr.vmem [resolvable:$true] %s312
          %s314 = sshll.u32 %s310, 4
          %s315 = int_to_ptr.hbm [resolvable:$true] %s314
          %317 = dma.vmem_to_hbm [thread:$0]  %s313, 128, %s315, %s299
        $region36: #{tpu_custom_call.1} parent=31 // pred_fallthru
          _
      $region32: #{tpu_custom_call.1} parent=5 // pred_fallthru
        _
      %p318 = scmp.le.s32.totalorder 2, %s12
      // Predicated region
      $region37: #{tpu_custom_call.1} parent=5 // pred_check
        %p319 = pneg %p318
      $region38: #{tpu_custom_call.1} parent=5 // pred_check_branch
        %321 = sbr.rel (%p319) target = $region40
      $region39: #{tpu_custom_call.1} parent=5 // pred_region
        %s322 = ssub.s32 %s12, 2
        // Predicated region
        $region41: #{tpu_custom_call.1} parent=39 // pred_check
          %p323 = pneg %p123
        $region42: #{tpu_custom_call.1} parent=39 // pred_check_branch
          %325 = sbr.rel (%p323) target = $region44
        $region43: #{tpu_custom_call.1} parent=39 // pred_region
          %s326 = sand.u32 %s108, 1
          %s327 = scalar_lea.sflag [#allocation3], %s326
          %s328 = sand.u32 %s108, 1
          %s329 = smul.addr %s328, 8
          %s330 = scalar_lea.vmem [#allocation2], %s329
          %332 = dma.done %s327, 128
        $region44: #{tpu_custom_call.1} parent=39 // pred_fallthru
          _
      $region40: #{tpu_custom_call.1} parent=5 // pred_fallthru
        _
    $region6: #{tpu_custom_call.1} parent=1 // loop_footer
      %s16 = sadd.s32 1, %s12
    $region7: #{tpu_custom_call.1} parent=1 // loop_footer_branch
      %11 = sbr.rel target = $region3
    $region8: #{tpu_custom_call.1} parent=1 // loop_exit
      _
    %333 = vsyncpa [#allocation3], 1
    %s334 = scalar_lea.sflag [#allocation3], 1
    %335 = vsyncpa %s334, 1

</llo_original>
